<compile_context>
chip_gen: v7x
topology: tpu7x:2x2x1
jax: 0.10.0
libtpu: 0.0.40
codegen_flags: <defaults>
</compile_context>

<pallas_src>
import functools

import jax
import jax.numpy as jnp
from jax.experimental import pallas as pl
from jax.experimental.pallas import tpu as pltpu

LANES = 128


def _round_up(x, m):
    return ((x + m - 1) // m) * m


def _fbeta_partial_kernel(pred_ref, tgt_ref, out_ref, *, beta, eps, approx):
    # pred_ref / tgt_ref: (B, tile_rows, 128); out_ref: (1, 8, 128)
    p = pred_ref[...].astype(jnp.float32)
    t = tgt_ref[...].astype(jnp.float32)

    p = jax.nn.sigmoid(jnp.clip(p, -10.0, 10.0))

    # Batch reduction; fp/fn derived from sum_p/sum_t (saves 2 full-size
    # multiplies + 2 full reductions on the pre-reduction path).
    sum_p = jnp.sum(p, axis=0)                 # (tile_rows, 128)
    sum_t = jnp.sum(t, axis=0)
    tp = jnp.sum(p * t, axis=0)
    fp = sum_p - tp
    fn = sum_t - tp

    if approx:
        def div(num, den):
            return num * pl.reciprocal(den, approx=True)
    else:
        def div(num, den):
            return num / den

    b2 = float(beta) * float(beta)
    precision = div(tp, tp + fp + eps)
    recall = div(tp, tp + fn + eps)
    fbeta = div((1.0 + b2) * precision * recall, b2 * precision + recall + eps)

    # Per-block (8, 128) partial: fold sublane groups with pure VPU adds
    # (reshape splits the sublane axis on its native (8, 128) tile boundary).
    rows = fbeta.shape[0]
    partial = jnp.sum(fbeta.reshape(rows // 8, 8, fbeta.shape[-1]), axis=0)
    out_ref[0] = partial


def soft_fbeta_loss(predictions, targets, beta=4, eps=1e-6, alpha=None,
                    max_tile_rows=512, approx_reciprocal=True,
                    storage_dtype=None):
    """Pallas TPU implementation of SoftFBetaLoss.forward (alpha=None path)."""
    if alpha is not None:
        # TODO(synk): per-class alpha would need a per-lane class-weight input
        # (class id == flat_idx % C) in the lane-dense layout; not implemented
        # (module default alpha=None is the supported path).
        raise NotImplementedError("alpha weighting not implemented")

    min_size = min(predictions.shape[1], targets.shape[1])
    # TODO(synk): the [:, :min_size, 4:] gather is still one fused XLA copy
    # pass over the inputs; folding the channel selection into the kernel
    # (full 12-channel lane-dense read + periodic channel mask) would remove
    # it when the raw shapes tile cleanly.
    pred_cls = predictions[:, :min_size, 4:]
    tgt_cls = targets[:, :min_size, 4:]
    B, N, C = pred_cls.shape
    total = N * C

    if storage_dtype is not None:
        pred_cls = pred_cls.astype(storage_dtype)
        tgt_cls = tgt_cls.astype(storage_dtype)

    itemsize = jnp.dtype(pred_cls.dtype).itemsize
    packing = max(1, 4 // itemsize)
    row_align = 8 * packing          # sublane-tile alignment for this dtype

    rows = pl.cdiv(total, LANES)
    # Cap the per-input block at ~2 MiB so 2 inputs x 2 pipeline buffers stay
    # around <= 8 MiB -- portable across v5e/v6e/v7x scoped-VMEM defaults.
    vmem_cap_rows = max(row_align, (2 * 1024 * 1024) // (B * LANES * itemsize))
    tile_rows = min(_round_up(rows, row_align), int(max_tile_rows),
                    vmem_cap_rows)
    tile_rows = max(row_align, (tile_rows // row_align) * row_align)
    rows_padded = _round_up(rows, tile_rows)
    num_blocks = rows_padded // tile_rows
    padded_total = rows_padded * LANES

    def lane_major(x):
        # Contiguous reshape (C is the minor axis) + zero pad; one fused pass.
        flat = x.reshape(B, total)
        if padded_total != total:
            flat = jnp.pad(flat, ((0, 0), (0, padded_total - total)))
        return flat.reshape(B, rows_padded, LANES)

    pred_lm = lane_major(pred_cls)
    tgt_lm = lane_major(tgt_cls)

    kernel = functools.partial(_fbeta_partial_kernel, beta=float(beta),
                               eps=float(eps), approx=bool(approx_reciprocal))

    partials = pl.pallas_call(
        kernel,
        out_shape=jax.ShapeDtypeStruct((num_blocks, 8, LANES), jnp.float32),
        grid=(num_blocks,),
        in_specs=[
            pl.BlockSpec((B, tile_rows, LANES), lambda i: (0, i, 0)),
            pl.BlockSpec((B, tile_rows, LANES), lambda i: (0, i, 0)),
        ],
        out_specs=pl.BlockSpec((1, 8, LANES), lambda i: (i, 0, 0)),
        compiler_params=pltpu.CompilerParams(
            dimension_semantics=("parallel",)),
    )(pred_lm, tgt_lm)

    return 1.0 - jnp.sum(partials) / jnp.float32(total)


def _reference_loss(predictions, targets, beta=4, eps=1e-6):
    """Plain-JAX reference mirroring the PyTorch forward."""
    min_size = min(predictions.shape[1], targets.shape[1])
    pred_cls = predictions[:, :min_size, 4:]
    tgt_cls = targets[:, :min_size, 4:]
    pred_cls = jnp.clip(pred_cls, -10.0, 10.0)
    pred_cls = jax.nn.sigmoid(pred_cls)
    tp = jnp.sum(pred_cls * tgt_cls, axis=0)
    fp = jnp.sum(pred_cls * (1.0 - tgt_cls), axis=0)
    fn = jnp.sum((1.0 - pred_cls) * tgt_cls, axis=0)
    precision = tp / (tp + fp + eps)
    recall = tp / (tp + fn + eps)
    b2 = beta * beta
    fbeta = (1.0 + b2) * precision * recall / (b2 * precision + recall + eps)
    return 1.0 - jnp.mean(fbeta)


if __name__ == "__main__":
    key = jax.random.PRNGKey(0)
    k1, k2, k3, k4 = jax.random.split(key, 4)

    # Case 1: small shapes. predictions [B=2, N=130, 4 box + 8 cls], targets
    # [B=2, N=120, 12] -> min_size=120 exercises anchor truncation, and
    # 120*8 = 960 class elems -> padded to 1024 exercises lane padding.
    preds1 = jax.random.normal(k1, (2, 130, 12), dtype=jnp.float32) * 3.0
    tgts1 = (jax.random.uniform(k2, (2, 120, 12)) > 0.5).astype(jnp.float32)
    ref1 = _reference_loss(preds1, tgts1)

    loss1_exact = jax.block_until_ready(
        soft_fbeta_loss(preds1, tgts1, approx_reciprocal=False))
    assert jnp.allclose(loss1_exact, ref1, rtol=1e-5, atol=1e-5), (
        loss1_exact, ref1)

    loss1 = jax.block_until_ready(soft_fbeta_loss(preds1, tgts1))
    assert jnp.allclose(loss1, ref1, rtol=2e-3, atol=2e-3), (loss1, ref1)

    # Case 2: multi-block "parallel" grid + padded tail (forced small tile).
    preds2 = jax.random.normal(k3, (2, 1030, 12), dtype=jnp.float32) * 3.0
    tgts2 = (jax.random.uniform(k4, (2, 1000, 12)) > 0.5).astype(jnp.float32)
    ref2 = _reference_loss(preds2, tgts2)
    loss2 = jax.block_until_ready(
        soft_fbeta_loss(preds2, tgts2, max_tile_rows=32,
                        approx_reciprocal=False))
    assert jnp.allclose(loss2, ref2, rtol=1e-5, atol=1e-5), (loss2, ref2)

    # Case 3: bf16 storage (half the HBM traffic); compute stays f32 in-kernel.
    loss1_bf16 = jax.block_until_ready(
        soft_fbeta_loss(preds1, tgts1, storage_dtype=jnp.bfloat16))
    assert jnp.allclose(loss1_bf16, ref1, rtol=5e-2, atol=5e-2), (
        loss1_bf16, ref1)

    print("KERNEL_OK")
</pallas_src>

<mosaic_0001>
module attributes {stable_mosaic.version = 11 : i64} {
  func.func @_fbeta_partial_kernel(%arg0: i32, %arg1: memref<2x8x128xf32, #tpu.memory_space<vmem>>, %arg2: memref<2x8x128xf32, #tpu.memory_space<vmem>>, %arg3: memref<1x8x128xf32, #tpu.memory_space<vmem>>) attributes {dimension_semantics = [#tpu.dimension_semantics<parallel>], iteration_bounds = array<i64: 1>, scalar_prefetch = 0 : i64, scratch_operands = 0 : i64, tpu.core_type = #tpu.core_type<tc>, window_params = [{transform_indices = @transform_0, window_bounds = array<i64: 2, 8, 128>}, {transform_indices = @transform_1, window_bounds = array<i64: 2, 8, 128>}, {transform_indices = @transform_2, window_bounds = array<i64: 1, 8, 128>}]} {
    %c0 = arith.constant 0 : index
    %c0_0 = arith.constant 0 : index
    %c0_1 = arith.constant 0 : index
    %0 = vector.load %arg1[%c0, %c0_0, %c0_1] : memref<2x8x128xf32, #tpu.memory_space<vmem>>, vector<2x8x128xf32>
    %c0_2 = arith.constant 0 : index
    %c0_3 = arith.constant 0 : index
    %c0_4 = arith.constant 0 : index
    %1 = vector.load %arg2[%c0_2, %c0_3, %c0_4] : memref<2x8x128xf32, #tpu.memory_space<vmem>>, vector<2x8x128xf32>
    %cst = arith.constant -1.000000e+01 : f32
    %cst_5 = arith.constant 1.000000e+01 : f32
    %2 = vector.broadcast %cst : f32 to vector<2x8x128xf32>
    %3 = arith.maximumf %2, %0 : vector<2x8x128xf32>
    %4 = vector.broadcast %cst_5 : f32 to vector<2x8x128xf32>
    %5 = arith.minimumf %4, %3 : vector<2x8x128xf32>
    %6 = arith.negf %5 : vector<2x8x128xf32>
    %7 = math.exp %6 : vector<2x8x128xf32>
    %cst_6 = arith.constant 1.000000e+00 : f32
    %8 = vector.broadcast %cst_6 : f32 to vector<2x8x128xf32>
    %9 = arith.addf %8, %7 : vector<2x8x128xf32>
    %10 = arith.divf %8, %9 : vector<2x8x128xf32>
    %cst_7 = arith.constant dense<0.000000e+00> : vector<8x128xf32>
    %11 = vector.multi_reduction <add>, %10, %cst_7 [0] : vector<2x8x128xf32> to vector<8x128xf32>
    %cst_8 = arith.constant dense<0.000000e+00> : vector<8x128xf32>
    %12 = vector.multi_reduction <add>, %1, %cst_8 [0] : vector<2x8x128xf32> to vector<8x128xf32>
    %13 = arith.mulf %10, %1 : vector<2x8x128xf32>
    %cst_9 = arith.constant dense<0.000000e+00> : vector<8x128xf32>
    %14 = vector.multi_reduction <add>, %13, %cst_9 [0] : vector<2x8x128xf32> to vector<8x128xf32>
    %15 = arith.subf %11, %14 : vector<8x128xf32>
    %16 = arith.subf %12, %14 : vector<8x128xf32>
    %17 = arith.addf %14, %15 : vector<8x128xf32>
    %cst_10 = arith.constant 9.99999997E-7 : f32
    %18 = vector.broadcast %cst_10 : f32 to vector<8x128xf32>
    %19 = arith.addf %17, %18 : vector<8x128xf32>
    %20 = arith.divf %14, %19 : vector<8x128xf32>
    %21 = arith.addf %14, %16 : vector<8x128xf32>
    %cst_11 = arith.constant 9.99999997E-7 : f32
    %22 = vector.broadcast %cst_11 : f32 to vector<8x128xf32>
    %23 = arith.addf %21, %22 : vector<8x128xf32>
    %24 = arith.divf %14, %23 : vector<8x128xf32>
    %cst_12 = arith.constant 1.700000e+01 : f32
    %25 = vector.broadcast %cst_12 : f32 to vector<8x128xf32>
    %26 = arith.mulf %25, %20 : vector<8x128xf32>
    %27 = arith.mulf %26, %24 : vector<8x128xf32>
    %cst_13 = arith.constant 1.600000e+01 : f32
    %28 = vector.broadcast %cst_13 : f32 to vector<8x128xf32>
    %29 = arith.mulf %28, %20 : vector<8x128xf32>
    %30 = arith.addf %29, %24 : vector<8x128xf32>
    %cst_14 = arith.constant 9.99999997E-7 : f32
    %31 = vector.broadcast %cst_14 : f32 to vector<8x128xf32>
    %32 = arith.addf %30, %31 : vector<8x128xf32>
    %33 = arith.divf %27, %32 : vector<8x128xf32>
    %34 = vector.shape_cast %33 : vector<8x128xf32> to vector<1x8x128xf32>
    %cst_15 = arith.constant dense<0.000000e+00> : vector<8x128xf32>
    %35 = vector.multi_reduction <add>, %34, %cst_15 [0] : vector<1x8x128xf32> to vector<8x128xf32>
    %c0_16 = arith.constant 0 : index
    %c0_17 = arith.constant 0 : index
    %c0_18 = arith.constant 0 : index
    %36 = vector.load %arg3[%c0_16, %c0_17, %c0_18] : memref<1x8x128xf32, #tpu.memory_space<vmem>>, vector<1x8x128xf32>
    %37 = vector.shape_cast %36 : vector<1x8x128xf32> to vector<8x128xf32>
    %38 = vector.shape_cast %35 : vector<8x128xf32> to vector<1x8x128xf32>
    tpu.vector_store %arg3[%c0_16, %c0_17, %c0_18], %38 {strides = array<i32>} : memref<1x8x128xf32, #tpu.memory_space<vmem>>, vector<1x8x128xf32>,
    return
  }
  func.func @transform_0(%arg0: i32) -> (i32, i32, i32) {
    %c0_i32 = arith.constant 0 : i32
    %c0_i32_0 = arith.constant 0 : i32
    %c0_i32_1 = arith.constant 0 : i32
    return %c0_i32, %arg0, %c0_i32_0 : i32, i32, i32
  }
  func.func @transform_1(%arg0: i32) -> (i32, i32, i32) {
    %c0_i32 = arith.constant 0 : i32
    %c0_i32_0 = arith.constant 0 : i32
    %c0_i32_1 = arith.constant 0 : i32
    return %c0_i32, %arg0, %c0_i32_0 : i32, i32, i32
  }
  func.func @transform_2(%arg0: i32) -> (i32, i32, i32) {
    %c0_i32 = arith.constant 0 : i32
    %c0_i32_0 = arith.constant 0 : i32
    %c0_i32_1 = arith.constant 0 : i32
    return %arg0, %c0_i32, %c0_i32_0 : i32, i32, i32
  }
}

</mosaic_0001>

<llo_original>
// kernel: tpu_custom_call.1
$region0: #{tpu_custom_call.1}
  #allocation0 [shape = 'u32[]', space=smem, size = 0x4, offset = 0x4, fixed_abs, tag = 'smem constant byte address 0x4 - core index']
  #allocation1 [shape = 'u32[144,128]{1,0:T(1,128)}', space=vmem, size = 0x12000, scoped, tag = 'internal scratch']
  %s0 = inlined_call_operand.hbm [shape: f32[2,8,128], index: 0, kind: input, shape index: {}]
  %s1 = inlined_call_operand.hbm [shape: f32[2,8,128], index: 1, kind: input, shape index: {}]
  %s2 = inlined_call_operand.hbm [shape: f32[1,8,128], index: 2, kind: output, shape index: {}]
  %s3 = sld [smem:[#allocation0]]
  $region26: #{tpu_custom_call.1} parent=0
    _
  %s5 = ssub.s32 1, %s3
  %s6 = scalar_select 0, %s5, %s3
  $region1: #{tpu_custom_call.1} parent=0
    #allocation2 [shape = 'u8[8192]{0}', space=vmem, size = 0x2000, scoped, tag = 'input window, operand 0, single buffered']
    #allocation3 [shape = 's32[1]{0}', space=sflag, size = 0x4, scoped, tag = 'scoped memory for tpu_custom_call.1']
    #allocation4 [shape = 's32[1]{0}', space=sflag, size = 0x4, scoped, tag = 'scoped memory for tpu_custom_call.1']
    #allocation5 [shape = 'u8[8192]{0}', space=vmem, size = 0x2000, scoped, tag = 'input window, operand 1, single buffered']
    #allocation6 [shape = 's32[1]{0}', space=sflag, size = 0x4, scoped, tag = 'scoped memory for tpu_custom_call.1']
    #allocation7 [shape = 'u8[4096]{0}', space=vmem, size = 0x1000, scoped, tag = 'output window, operand 0, single buffered']
    %7 = vsyncpa [#allocation3], 0
    %8 = vsyncpa [#allocation6], 0
    %9 = vsyncpa [#allocation4], 0
    // Predicated region
    $region2: #{tpu_custom_call.1} parent=1 // pred_check
      _
    $region3: #{tpu_custom_call.1} parent=1 // pred_check_branch
      %11 = sbr.rel (0) target = $region5
    $region4: #{tpu_custom_call.1} parent=1 // pred_region
      %s13 = ssub.s32 256, 256
      %14 = vsyncadd [#allocation3], %s13
      %s15 = sshll.u32 [#allocation2], 4
      %s16 = int_to_ptr.vmem [resolvable:$true] %s15
      %21 = dma.hbm_to_vmem [thread:$0]  %s0, 256, %s16, [#allocation3], 128, 128, 8
    $region5: #{tpu_custom_call.1} parent=1 // pred_fallthru
      _
    // Predicated region
    $region6: #{tpu_custom_call.1} parent=1 // pred_check
      _
    $region7: #{tpu_custom_call.1} parent=1 // pred_check_branch
      %23 = sbr.rel (0) target = $region9
    $region8: #{tpu_custom_call.1} parent=1 // pred_region
      %s25 = ssub.s32 256, 256
      %26 = vsyncadd [#allocation6], %s25
      %s27 = sshll.u32 [#allocation5], 4
      %s28 = int_to_ptr.vmem [resolvable:$true] %s27
      %33 = dma.hbm_to_vmem [thread:$0]  %s1, 256, %s28, [#allocation6], 128, 128, 8
    $region9: #{tpu_custom_call.1} parent=1 // pred_fallthru
      _
    // Predicated region
    $region10: #{tpu_custom_call.1} parent=1 // pred_check
      _
    $region11: #{tpu_custom_call.1} parent=1 // pred_check_branch
      %35 = sbr.rel (0) target = $region13
    $region12: #{tpu_custom_call.1} parent=1 // pred_region
      %36 = dma.done [#allocation3], 256
    $region13: #{tpu_custom_call.1} parent=1 // pred_fallthru
      _
    // Predicated region
    $region14: #{tpu_custom_call.1} parent=1 // pred_check
      _
    $region15: #{tpu_custom_call.1} parent=1 // pred_check_branch
      %38 = sbr.rel (0) target = $region17
    $region16: #{tpu_custom_call.1} parent=1 // pred_region
      %39 = dma.done [#allocation6], 256
    $region17: #{tpu_custom_call.1} parent=1 // pred_fallthru
      _
    %v40 = vld [vmem:[#allocation2] sm:$0xff]
    %v41 = vld [vmem:[#allocation2 + $0x8] sm:$0xff]
    %v42 = vld [vmem:[#allocation5] sm:$0xff]
    %v43 = vld [vmem:[#allocation5 + $0x8] sm:$0xff]
    %v44 = vmax.f32 %v40, -10.0
    %v45 = vmax.f32 %v41, -10.0
    %v46 = vmin.f32 %v44, 10.0
    %v47 = vmin.f32 %v45, 10.0
    %v48 = vxor.u32 %v46, 2147483648
    %v49 = vxor.u32 %v47, 2147483648
    %v50 = vmul.f32 %v48, 1.442695
    %v51 = vpow.pop %v50
    %v52 = vmul.f32 %v49, 1.442695
    %v53 = vpow.pop %v52
    %v54 = vadd.f32 %v51, 1.0
    %v55 = vadd.f32 %v53, 1.0
    %v56 = vrcp.pop %v54
    %v57 = vmul.f32 1.0, %v56
    %v58 = vrcp.pop %v55
    %v59 = vmul.f32 1.0, %v58
    %v60 = vadd.f32 %v57, %v59
    %v61 = vadd.f32 %v42, %v43
    %v62 = vmul.f32 %v57, %v42
    %v63 = vmul.f32 %v59, %v43
    %v64 = vadd.f32 %v62, %v63
    %v65 = vsub.f32 %v60, %v64
    %v66 = vsub.f32 %v61, %v64
    %v67 = vadd.f32 %v64, %v65
    %v68 = vadd.f32 %v67, 1e-06
    %v69 = vrcp.pop %v68
    %v70 = vmul.f32 %v64, %v69
    %v71 = vadd.f32 %v64, %v66
    %v72 = vadd.f32 %v71, 1e-06
    %v73 = vrcp.pop %v72
    %v74 = vmul.f32 %v64, %v73
    %v75 = vmul.f32 %v70, 17.0
    %v76 = vmul.f32 %v75, %v74
    %v77 = vmul.f32 %v70, 16.0
    %v78 = vadd.f32 %v77, %v74
    %v79 = vadd.f32 %v78, 1e-06
    %v80 = vrcp.pop %v79
    %v81 = vmul.f32 %v76, %v80
    %v82 = vadd.f32 %v81, 0.0
    %83 = vst [vmem:[#allocation7] sm:$0xff] %v82
    // Predicated region
    $region18: #{tpu_custom_call.1} parent=1 // pred_check
      _
    $region19: #{tpu_custom_call.1} parent=1 // pred_check_branch
      %85 = sbr.rel (0) target = $region21
    $region20: #{tpu_custom_call.1} parent=1 // pred_region
      %s87 = ssub.s32 128, 128
      %88 = vsyncadd [#allocation4], %s87
      %s90 = sshll.u32 [#allocation7], 4
      %s91 = int_to_ptr.vmem [resolvable:$true] %s90
      %93 = dma.vmem_to_hbm [thread:$0]  %s91, 128, %s2, [#allocation4]
    $region21: #{tpu_custom_call.1} parent=1 // pred_fallthru
      _
    // Predicated region
    $region22: #{tpu_custom_call.1} parent=1 // pred_check
      _
    $region23: #{tpu_custom_call.1} parent=1 // pred_check_branch
      %95 = sbr.rel (0) target = $region25
    $region24: #{tpu_custom_call.1} parent=1 // pred_region
      %96 = dma.done [#allocation4], 128
    $region25: #{tpu_custom_call.1} parent=1 // pred_fallthru
      _
    %97 = vsyncpa [#allocation3], 1
    %98 = vsyncpa [#allocation6], 1
    %99 = vsyncpa [#allocation4], 1

</llo_original>
